<compile_context>
chip_gen: v7x
topology: tpu7x:2x2x1
jax: 0.10.0
libtpu: 0.0.40
codegen_flags: <defaults>
</compile_context>

<pallas_src>
import math

import jax
import jax.numpy as jnp
from jax.experimental import pallas as pl
from jax.experimental.pallas import tpu as pltpu


def _spatial_dropout_kernel(x_ref, m_ref, o_ref):
    """x_ref: (1, tT, tD), m_ref: (1, 1, tD) already scaled by 1/keep_prob."""
    o_ref[...] = (x_ref[...] * m_ref[...]).astype(o_ref.dtype)


def _plan_tiling(T, D, dtype, target_bytes=4 * 1024 * 1024):
    """Pick a lane-dense grouping factor g and tile sizes (tT, tD) for the
    grouped view (B, T//g, g*D)."""
    itemsize = jnp.dtype(dtype).itemsize
    # dtype-specific sublane multiple: f32 -> 8, bf16/f16 -> 16, int8/fp8 -> 32
    sub = {1: 32, 2: 16}.get(itemsize, 8)

    # --- lane-dense grouping of consecutive timesteps into the channel dim ---
    g = 1
    if D % 128 != 0:
        g0 = 128 // math.gcd(D, 128)
        if T % g0 == 0:
            g = g0
        # TODO(synk): if g0 does not divide T, pad the sequence dim in the
        # wrapper instead of falling back to masked (partial-lane) stores.
    if (g * D) % 128 == 0:
        # Widen narrow rows a bit further while it stays free (still divides T).
        while T % (2 * g) == 0 and 2 * g * D * itemsize <= 2048:
            g *= 2

    Dg, Tg = g * D, T // g

    # --- tile sizes for the grouped view ---
    row_bytes = Dg * itemsize
    rows = target_bytes // max(1, row_bytes)
    if rows >= Tg:
        tT, tD = Tg, Dg                      # whole (batch-row) fits in one tile
    elif rows >= sub:
        tT, tD = (rows // sub) * sub, Dg     # tile the sequence axis only
    else:
        # Very wide D: tile the channel axis too (multiple of 128 lanes) so a
        # single buffer can never exceed the VMEM budget.
        tT = min(sub, Tg)
        lanes = max(128, (target_bytes // (tT * itemsize)) // 128 * 128)
        tD = min(lanes, pl.cdiv(Dg, 128) * 128)

    nT = pl.cdiv(Tg, tT)
    nD = pl.cdiv(Dg, tD)
    return g, Tg, Dg, tT, tD, nT, nD


def spatial_dropout(x, drop_prob, key, training=True):
    """JAX/Pallas equivalent of SpatialDropout.forward.

    x: (B, T, D) array.  key: jax PRNG key for the dropout mask.
    Returns an array of the same shape/dtype.
    """
    if (not training) or drop_prob == 0.0:
        return x
    if drop_prob == 1.0:
        # PyTorch fills the noise with zeros in this degenerate case.
        return jnp.zeros_like(x)

    B, T, D = x.shape
    keep_prob = 1.0 - float(drop_prob)
    itemsize = jnp.dtype(x.dtype).itemsize

    # Per-(batch, channel) keep mask, pre-scaled by 1/keep_prob.  For sub-2-byte
    # activations (fp8/int8) keep the scaled mask in f32 and let the multiply
    # upcast (avoids a several-percent scale rounding error); otherwise stay in
    # x.dtype so the kernel is a pure native-dtype load-multiply-store.
    mask_dtype = x.dtype if itemsize >= 2 else jnp.float32
    keep = jax.random.bernoulli(key, p=keep_prob, shape=(B, 1, D))
    mask = keep.astype(mask_dtype) * jnp.asarray(1.0 / keep_prob, dtype=mask_dtype)

    g, Tg, Dg, tT, tD, nT, nD = _plan_tiling(T, D, x.dtype)

    if g > 1:
        # Free contiguous reshape: g consecutive timesteps share one row, so the
        # per-channel mask is simply repeated g times along the last dim.
        xg = x.reshape(B, Tg, Dg)
        maskg = jnp.tile(mask, (1, 1, g))
    else:
        xg, maskg = x, mask

    cost = pl.CostEstimate(
        flops=B * T * D,
        bytes_accessed=2 * B * T * D * itemsize
        + B * D * jnp.dtype(mask_dtype).itemsize,
        transcendentals=0,
    )

    y = pl.pallas_call(
        _spatial_dropout_kernel,
        out_shape=jax.ShapeDtypeStruct((B, Tg, Dg), x.dtype),
        grid=(B, nD, nT),  # sequence axis innermost: mask block stays resident
        in_specs=[
            pl.BlockSpec((1, tT, tD), lambda b, d, t: (b, t, d)),  # x tile
            pl.BlockSpec((1, 1, tD), lambda b, d, t: (b, 0, d)),   # per-batch mask
        ],
        out_specs=pl.BlockSpec((1, tT, tD), lambda b, d, t: (b, t, d)),
        compiler_params=pltpu.CompilerParams(
            dimension_semantics=("parallel", "parallel", "parallel"),
            vmem_limit_bytes=40 << 20,
        ),
        cost_estimate=cost,
    )(xg, maskg)

    if g > 1:
        y = y.reshape(B, T, D)
    return y


def _check_case(x, drop_prob, key, atol):
    keep_prob = 1.0 - drop_prob
    y = jax.block_until_ready(spatial_dropout(x, drop_prob, key, training=True))

    # Exact reference: recompute the same mask from the same key.
    keep_ref = jax.random.bernoulli(key, p=keep_prob, shape=(x.shape[0], 1, x.shape[2]))
    mask_ref = keep_ref.astype(x.dtype) * jnp.asarray(1.0 / keep_prob, dtype=x.dtype)
    y_ref = x.astype(jnp.float32) * mask_ref.astype(jnp.float32)
    assert jnp.allclose(y.astype(jnp.float32), y_ref, atol=atol), \
        "kernel output != reference"

    # Channel consistency: each (batch, feature) column is all-zero or x/keep.
    xf = x.astype(jnp.float32)
    yf = y.astype(jnp.float32)
    ratio = jnp.where(jnp.abs(xf) > 1e-3, yf / xf, 0.0)
    per_channel_zero = jnp.all(jnp.abs(yf) < 1e-6, axis=1)
    per_channel_kept = jnp.all(jnp.abs(ratio - 1.0 / keep_prob) < 1e-1, axis=1)
    assert bool(jnp.all(per_channel_zero | per_channel_kept)), \
        "mask not channel-consistent"
    return y


if __name__ == "__main__":
    root = jax.random.PRNGKey(0)
    kx, kmask, kx2, kmask2 = jax.random.split(root, 4)

    drop_prob = 0.5

    # Small f32 case (D=32 exercises the lane-dense grouping path: 8*32 -> 256).
    B, T, D = 2, 8, 32
    x = jax.random.normal(kx, (B, T, D), dtype=jnp.float32)
    _check_case(x, drop_prob, kmask, atol=1e-6)

    # bf16 case with D a multiple of 16 but not 128 (exercises dtype-aware tiling).
    x2 = jax.random.normal(kx2, (2, 32, 48), dtype=jnp.bfloat16)
    _check_case(x2, drop_prob, kmask2, atol=1e-2)

    # Eval mode / p == 0 returns the input unchanged; p == 1 zeros everything.
    y_eval = spatial_dropout(x, drop_prob, kmask, training=False)
    assert bool(jnp.all(y_eval == x))
    y_none = spatial_dropout(x, 0.0, kmask, training=True)
    assert bool(jnp.all(y_none == x))
    y_all = jax.block_until_ready(spatial_dropout(x, 1.0, kmask, training=True))
    assert bool(jnp.all(y_all == 0))

    print("KERNEL_OK")
</pallas_src>

<mosaic_0001>
module attributes {stable_mosaic.version = 11 : i64} {
  func.func @_spatial_dropout_kernel(%arg0: i32, %arg1: i32, %arg2: i32, %arg3: memref<1x1x256xf32, #tpu.memory_space<vmem>>, %arg4: memref<1x1x256xf32, #tpu.memory_space<vmem>>, %arg5: memref<1x1x256xf32, #tpu.memory_space<vmem>>) attributes {dimension_semantics = [#tpu.dimension_semantics<parallel>, #tpu.dimension_semantics<parallel>, #tpu.dimension_semantics<parallel>], iteration_bounds = array<i64: 2, 1, 1>, scalar_prefetch = 0 : i64, scratch_operands = 0 : i64, tpu.core_type = #tpu.core_type<tc>, window_params = [{transform_indices = @transform_0, window_bounds = array<i64: 1, 1, 256>}, {transform_indices = @transform_1, window_bounds = array<i64: 1, 1, 256>}, {transform_indices = @transform_2, window_bounds = array<i64: 1, 1, 256>}]} {
    %c0 = arith.constant 0 : index
    %c0_0 = arith.constant 0 : index
    %c0_1 = arith.constant 0 : index
    %0 = vector.load %arg3[%c0, %c0_0, %c0_1] : memref<1x1x256xf32, #tpu.memory_space<vmem>>, vector<1x1x256xf32>
    %c0_2 = arith.constant 0 : index
    %c0_3 = arith.constant 0 : index
    %c0_4 = arith.constant 0 : index
    %1 = vector.load %arg4[%c0_2, %c0_3, %c0_4] : memref<1x1x256xf32, #tpu.memory_space<vmem>>, vector<1x1x256xf32>
    %2 = arith.mulf %0, %1 : vector<1x1x256xf32>
    %c0_5 = arith.constant 0 : index
    %c0_6 = arith.constant 0 : index
    %c0_7 = arith.constant 0 : index
    %3 = vector.load %arg5[%c0_5, %c0_6, %c0_7] : memref<1x1x256xf32, #tpu.memory_space<vmem>>, vector<1x1x256xf32>
    tpu.vector_store %arg5[%c0_5, %c0_6, %c0_7], %2 {strides = array<i32>} : memref<1x1x256xf32, #tpu.memory_space<vmem>>, vector<1x1x256xf32>,
    return
  }
  func.func @transform_0(%arg0: i32, %arg1: i32, %arg2: i32) -> (i32, i32, i32) {
    %c0_i32 = arith.constant 0 : i32
    return %arg0, %arg2, %arg1 : i32, i32, i32
  }
  func.func @transform_1(%arg0: i32, %arg1: i32, %arg2: i32) -> (i32, i32, i32) {
    %c0_i32 = arith.constant 0 : i32
    %c0_i32_0 = arith.constant 0 : i32
    return %arg0, %c0_i32, %arg1 : i32, i32, i32
  }
  func.func @transform_2(%arg0: i32, %arg1: i32, %arg2: i32) -> (i32, i32, i32) {
    %c0_i32 = arith.constant 0 : i32
    return %arg0, %arg2, %arg1 : i32, i32, i32
  }
}

</mosaic_0001>

<llo_original>
// kernel: tpu_custom_call.1
$region0: #{tpu_custom_call.1}
  #allocation0 [shape = 'u32[]', space=smem, size = 0x4, offset = 0x4, fixed_abs, tag = 'smem constant byte address 0x4 - core index']
  #allocation1 [shape = 'u32[144,128]{1,0:T(1,128)}', space=vmem, size = 0x12000, scoped, tag = 'internal scratch']
  %s0 = inlined_call_operand.hbm [shape: f32[2,1,256], index: 0, kind: input, shape index: {}]
  %s1 = inlined_call_operand.hbm [shape: f32[2,1,256], index: 1, kind: input, shape index: {}]
  %s2 = inlined_call_operand.hbm [shape: f32[2,1,256], index: 2, kind: output, shape index: {}]
  %s3 = sld [smem:[#allocation0]]
  $region49: #{tpu_custom_call.1} parent=0
    _
  %s5 = ssub.s32 1, %s3
  %s6 = scalar_select 0, %s5, %s3
  $region1: #{tpu_custom_call.1} parent=0
    #allocation2 [shape = 'u8[2048]{0}', space=vmem, size = 0x800, scoped, tag = 'input window, operand 0']
    #allocation3 [shape = 's32[2]{0}', space=sflag, size = 0x8, scoped, tag = 'scoped memory for tpu_custom_call.1']
    #allocation4 [shape = 's32[2]{0}', space=sflag, size = 0x8, scoped, tag = 'scoped memory for tpu_custom_call.1']
    #allocation5 [shape = 'u8[2048]{0}', space=vmem, size = 0x800, scoped, tag = 'input window, operand 1']
    #allocation6 [shape = 's32[2]{0}', space=sflag, size = 0x8, scoped, tag = 'scoped memory for tpu_custom_call.1']
    #allocation7 [shape = 'u8[2048]{0}', space=vmem, size = 0x800, scoped, tag = 'output window, operand 0']
    %7 = vsyncpa [#allocation3], 0
    %s8 = scalar_lea.sflag [#allocation3], 1
    %9 = vsyncpa %s8, 0
    %10 = vsyncpa [#allocation6], 0
    %s11 = scalar_lea.sflag [#allocation6], 1
    %12 = vsyncpa %s11, 0
    %13 = vsyncpa [#allocation4], 0
    %s14 = scalar_lea.sflag [#allocation4], 1
    %15 = vsyncpa %s14, 0
    loop: start=0, step=1, limit=4
    $region2: #{tpu_custom_call.1} parent=1 // loop_pre_header
      _
    $region3: #{tpu_custom_call.1} parent=1 // loop_header
      %s17 = sphi 0, %s21
      %p18 = scmp.ge.s32.totalorder %s17, 4
      %s24 = sphi 0, %s43
      %s25 = sphi 0, %s39
      %s26 = sphi 0, %s35
      %s27 = sphi 0, %s24
      %s28 = sphi 0, %s25
      %s29 = sphi 0, %s26
      %s30 = sphi 0, %s27
      %s31 = sphi 0, %s28
      %s32 = sphi 0, %s29
      %s50 = sphi 0, %s52
      %s53 = sphi 0, %s50
      %s54 = sphi 0, %s53
      %s70 = sphi 0, %s54
      %s78 = sphi 0, %s80
      %s81 = sphi 0, %s78
      %s82 = sphi 0, %s81
      %s98 = sphi 0, %s82
      %s108 = sphi 0, %s110
      %s111 = sphi 0, %s108
      %s112 = sphi 0, %s111
      %s128 = sphi 0, %s112
    $region4: #{tpu_custom_call.1} parent=1 // loop_header_branch
      %20 = sbr.rel (%p18) target = $region8
    $region5: #{tpu_custom_call.1} parent=1 // loop_body
      %s22 = ssub.s32 %s17, 1
      %s23 = ssub.s32 %s17, 2
      %s33 = sadd.s32 1, %s26
      %p34 = scmp.ge.s32.totalorder %s33, 1
      %s35 = scalar_select %p34, 0, %s33
      %s36 = sadd.s32 1, %s25
      %s37 = scalar_select %p34, %s36, %s25
      %p38 = scmp.ge.s32.totalorder %s37, 1
      %s39 = scalar_select %p38, 0, %s37
      %s40 = sadd.s32 1, %s24
      %s41 = scalar_select %p38, %s40, %s24
      %p42 = scmp.ge.s32.totalorder %s41, 2
      %s43 = scalar_select %p42, 0, %s41
      %s44 = ssub.s32 %s24, %s43
      %s45 = ssub.s32 %s26, %s35
      %s46 = sor.u32 %s44, %s45
      %s47 = ssub.s32 %s25, %s39
      %s48 = sor.u32 %s46, %s47
      %p49 = scmp.eq.s32.totalorder %s48, 0
      %s51 = sadd.s32 %s50, 1
      %s52 = scalar_select %p49, %s50, %s51
      %p55 = pneg %p49
      %p56 = scmp.eq.s32.totalorder %s17, 1
      %p57 = por %p55, %p56
      %p58 = scmp.ne.s32.totalorder %s50, %s53
      %p59 = scmp.eq.s32.totalorder %s17, 0
      %p60 = por %p58, %p59
      %p61 = scmp.ne.s32.totalorder %s50, %s53
      %p62 = scmp.eq.s32.totalorder %s22, 1
      %p63 = por %p61, %p62
      %p64 = scmp.ne.s32.totalorder %s53, %s54
      %p65 = scmp.eq.s32.totalorder %s22, 0
      %p66 = por %p64, %p65
      %p67 = scmp.ne.s32.totalorder %s53, %s54
      %p68 = scmp.eq.s32.totalorder %s23, 1
      %p69 = por %p67, %p68
      %p71 = scmp.ne.s32.totalorder %s54, %s70
      %p72 = scmp.eq.s32.totalorder %s23, 0
      %p73 = por %p71, %p72
      %s74 = ssub.s32 %s24, %s43
      %s75 = ssub.s32 %s25, %s39
      %s76 = sor.u32 %s74, %s75
      %p77 = scmp.eq.s32.totalorder %s76, 0
      %s79 = sadd.s32 %s78, 1
      %s80 = scalar_select %p77, %s78, %s79
      %p83 = pneg %p77
      %p84 = scmp.eq.s32.totalorder %s17, 1
      %p85 = por %p83, %p84
      %p86 = scmp.ne.s32.totalorder %s78, %s81
      %p87 = scmp.eq.s32.totalorder %s17, 0
      %p88 = por %p86, %p87
      %p89 = scmp.ne.s32.totalorder %s78, %s81
      %p90 = scmp.eq.s32.totalorder %s22, 1
      %p91 = por %p89, %p90
      %p92 = scmp.ne.s32.totalorder %s81, %s82
      %p93 = scmp.eq.s32.totalorder %s22, 0
      %p94 = por %p92, %p93
      %p95 = scmp.ne.s32.totalorder %s81, %s82
      %p96 = scmp.eq.s32.totalorder %s23, 1
      %p97 = por %p95, %p96
      %p99 = scmp.ne.s32.totalorder %s82, %s98
      %p100 = scmp.eq.s32.totalorder %s23, 0
      %p101 = por %p99, %p100
      %s102 = ssub.s32 %s24, %s43
      %s103 = ssub.s32 %s26, %s35
      %s104 = sor.u32 %s102, %s103
      %s105 = ssub.s32 %s25, %s39
      %s106 = sor.u32 %s104, %s105
      %p107 = scmp.eq.s32.totalorder %s106, 0
      %s109 = sadd.s32 %s108, 1
      %s110 = scalar_select %p107, %s108, %s109
      %p113 = pneg %p107
      %p114 = scmp.eq.s32.totalorder %s17, 1
      %p115 = por %p113, %p114
      %p116 = scmp.ne.s32.totalorder %s108, %s111
      %p117 = scmp.eq.s32.totalorder %s17, 0
      %p118 = por %p116, %p117
      %p119 = scmp.ne.s32.totalorder %s108, %s111
      %p120 = scmp.eq.s32.totalorder %s22, 1
      %p121 = por %p119, %p120
      %p122 = scmp.ne.s32.totalorder %s111, %s112
      %p123 = scmp.eq.s32.totalorder %s22, 0
      %p124 = por %p122, %p123
      %p125 = scmp.ne.s32.totalorder %s111, %s112
      %p126 = scmp.eq.s32.totalorder %s23, 1
      %p127 = por %p125, %p126
      %p129 = scmp.ne.s32.totalorder %s112, %s128
      %p130 = scmp.eq.s32.totalorder %s23, 0
      %p131 = por %p129, %p130
      %p132 = scmp.le.s32.totalorder 1, %s17
      %p133 = scmp.lt.s32.totalorder %s17, 3
      %p134 = pnand %p132, %p133
      %p135 = pneg %p134
      // Predicated region
      $region9: #{tpu_custom_call.1} parent=5 // pred_check
        _
      $region10: #{tpu_custom_call.1} parent=5 // pred_check_branch
        %137 = sbr.rel (%p134) target = $region12
      $region11: #{tpu_custom_call.1} parent=5 // pred_region
        %s138 = ssub.s32 %s17, 1
      $region12: #{tpu_custom_call.1} parent=5 // pred_fallthru
        _
      %p139 = scmp.lt.s32.totalorder %s17, 2
      // Predicated region
      $region13: #{tpu_custom_call.1} parent=5 // pred_check
        %p140 = pneg %p139
      $region14: #{tpu_custom_call.1} parent=5 // pred_check_branch
        %142 = sbr.rel (%p140) target = $region16
      $region15: #{tpu_custom_call.1} parent=5 // pred_region
        // Predicated region
        $region17: #{tpu_custom_call.1} parent=15 // pred_check
          %p143 = pneg %p60
        $region18: #{tpu_custom_call.1} parent=15 // pred_check_branch
          %145 = sbr.rel (%p143) target = $region20
        $region19: #{tpu_custom_call.1} parent=15 // pred_region
          %s146 = sand.u32 %s50, 1
          %s147 = scalar_lea.sflag [#allocation3], %s146
          %s148 = sand.u32 %s50, 1
          %s149 = smul.addr %s148, 2
          %s150 = scalar_lea.vmem [#allocation2], %s149
          %s151 = smul.u32 2, %s25
          %s153 = ssub.s32 32, 32
          %154 = vsyncadd %s147, %s153
          %s155 = smul.addr %s26, 2
          %s156 = sadd.s32 %s151, %s155
          %s157 = smul.addr %s24, 2
          %s158 = sadd.s32 %s156, %s157
          %s159 = smul.addr %s158, 16
          %s160 = scalar_lea.hbm %s0, %s159
          %s162 = sshll.u32 %s150, 4
          %s163 = int_to_ptr.vmem [resolvable:$true] %s162
          %165 = dma.hbm_to_vmem [thread:$0]  %s160, 32, %s163, %s147
        $region20: #{tpu_custom_call.1} parent=15 // pred_fallthru
          _
        // Predicated region
        $region21: #{tpu_custom_call.1} parent=15 // pred_check
          %p166 = pneg %p88
        $region22: #{tpu_custom_call.1} parent=15 // pred_check_branch
          %168 = sbr.rel (%p166) target = $region24
        $region23: #{tpu_custom_call.1} parent=15 // pred_region
          %s169 = sand.u32 %s78, 1
          %s170 = scalar_lea.sflag [#allocation6], %s169
          %s171 = sand.u32 %s78, 1
          %s172 = smul.addr %s171, 2
          %s173 = scalar_lea.vmem [#allocation5], %s172
          %s174 = smul.u32 2, %s25
          %s176 = ssub.s32 32, 32
          %177 = vsyncadd %s170, %s176
          %s178 = smul.addr %s24, 2
          %s179 = sadd.s32 %s174, %s178
          %s180 = smul.addr %s179, 16
          %s181 = scalar_lea.hbm %s1, %s180
          %s183 = sshll.u32 %s173, 4
          %s184 = int_to_ptr.vmem [resolvable:$true] %s183
          %186 = dma.hbm_to_vmem [thread:$0]  %s181, 32, %s184, %s170
        $region24: #{tpu_custom_call.1} parent=15 // pred_fallthru
          _
      $region16: #{tpu_custom_call.1} parent=5 // pred_fallthru
        _
      %p187 = scmp.le.s32.totalorder 1, %s17
      %p188 = scmp.lt.s32.totalorder %s17, 3
      %p189 = pnand %p187, %p188
      %p190 = pneg %p189
      // Predicated region
      $region25: #{tpu_custom_call.1} parent=5 // pred_check
        _
      $region26: #{tpu_custom_call.1} parent=5 // pred_check_branch
        %192 = sbr.rel (%p189) target = $region28
      $region27: #{tpu_custom_call.1} parent=5 // pred_region
        %s193 = ssub.s32 %s17, 1
        %s194 = sand.u32 %s53, 1
        %s195 = scalar_lea.sflag [#allocation3], %s194
        %s196 = sand.u32 %s53, 1
        %s197 = smul.addr %s196, 2
        %s198 = scalar_lea.vmem [#allocation2], %s197
        // Predicated region
        $region29: #{tpu_custom_call.1} parent=27 // pred_check
          %p199 = pneg %p66
        $region30: #{tpu_custom_call.1} parent=27 // pred_check_branch
          %201 = sbr.rel (%p199) target = $region32
        $region31: #{tpu_custom_call.1} parent=27 // pred_region
          %202 = dma.done %s195, 32
        $region32: #{tpu_custom_call.1} parent=27 // pred_fallthru
          _
        %s203 = sand.u32 %s81, 1
        %s204 = scalar_lea.sflag [#allocation6], %s203
        %s205 = sand.u32 %s81, 1
        %s206 = smul.addr %s205, 2
        %s207 = scalar_lea.vmem [#allocation5], %s206
        // Predicated region
        $region33: #{tpu_custom_call.1} parent=27 // pred_check
          %p208 = pneg %p94
        $region34: #{tpu_custom_call.1} parent=27 // pred_check_branch
          %210 = sbr.rel (%p208) target = $region36
        $region35: #{tpu_custom_call.1} parent=27 // pred_region
          %211 = dma.done %s204, 32
        $region36: #{tpu_custom_call.1} parent=27 // pred_fallthru
          _
        %s212 = sand.u32 %s53, 1
        %s213 = scalar_lea.sflag [#allocation3], %s212
        %s214 = sand.u32 %s53, 1
        %s215 = smul.addr %s214, 2
        %s216 = scalar_lea.vmem [#allocation2], %s215
        %p217 = pneg %p66
        %p218 = pneg %p63
        %s219 = sand.u32 %s81, 1
        %s220 = scalar_lea.sflag [#allocation6], %s219
        %s221 = sand.u32 %s81, 1
        %s222 = smul.addr %s221, 2
        %s223 = scalar_lea.vmem [#allocation5], %s222
        %p224 = pneg %p94
        %p225 = pneg %p91
        %p226 = pneg %p124
        %p227 = pneg %p121
        %s228 = sand.u32 %s111, 1
        %s229 = scalar_lea.sflag [#allocation4], %s228
        %s230 = sand.u32 %s111, 1
        %s231 = smul.addr %s230, 2
        %s232 = scalar_lea.vmem [#allocation7], %s231
        %s233 = smul.u32 2, %s28
        %s234 = smul.u32 2, %s28
        %s235 = smul.u32 2, %s28
        %v236 = vld [vmem:[%s198] sm:$0x3]
        %v237 = vld [vmem:[%s207] sm:$0x3]
        %v238 = vmul.f32 %v236, %v237
        %v239 = vlaneseq
        %vm240 = vcmp.ge.s32.totalorder %v239, 0
        %vm241 = vcmp.lt.s32.totalorder %v239, 256
        %vm242 = vmand %vm240, %vm241
        %243 = vst.msk [vmem:[%s232] sm:$0x3] %vm242, %v238
        %s244 = sand.u32 %s111, 1
        %s245 = scalar_lea.sflag [#allocation4], %s244
        %s246 = sand.u32 %s111, 1
        %s247 = smul.addr %s246, 2
        %s248 = scalar_lea.vmem [#allocation7], %s247
        // Predicated region
        $region37: #{tpu_custom_call.1} parent=27 // pred_check
          %p249 = pneg %p121
        $region38: #{tpu_custom_call.1} parent=27 // pred_check_branch
          %251 = sbr.rel (%p249) target = $region40
        $region39: #{tpu_custom_call.1} parent=27 // pred_region
          %s252 = smul.u32 2, %s28
          %s254 = ssub.s32 32, 32
          %255 = vsyncadd %s245, %s254
          %s256 = smul.addr %s29, 2
          %s257 = sadd.s32 %s252, %s256
          %s258 = smul.addr %s27, 2
          %s259 = sadd.s32 %s257, %s258
          %s260 = smul.addr %s259, 16
          %s261 = scalar_lea.hbm %s2, %s260
          %s263 = sshll.u32 %s248, 4
          %s264 = int_to_ptr.vmem [resolvable:$true] %s263
          %266 = dma.vmem_to_hbm [thread:$0]  %s264, 32, %s261, %s245
        $region40: #{tpu_custom_call.1} parent=27 // pred_fallthru
          _
      $region28: #{tpu_custom_call.1} parent=5 // pred_fallthru
        _
      %p267 = scmp.le.s32.totalorder 2, %s17
      // Predicated region
      $region41: #{tpu_custom_call.1} parent=5 // pred_check
        %p268 = pneg %p267
      $region42: #{tpu_custom_call.1} parent=5 // pred_check_branch
        %270 = sbr.rel (%p268) target = $region44
      $region43: #{tpu_custom_call.1} parent=5 // pred_region
        %s271 = ssub.s32 %s17, 2
        // Predicated region
        $region45: #{tpu_custom_call.1} parent=43 // pred_check
          %p272 = pneg %p127
        $region46: #{tpu_custom_call.1} parent=43 // pred_check_branch
          %274 = sbr.rel (%p272) target = $region48
        $region47: #{tpu_custom_call.1} parent=43 // pred_region
          %s275 = sand.u32 %s112, 1
          %s276 = scalar_lea.sflag [#allocation4], %s275
          %s277 = sand.u32 %s112, 1
          %s278 = smul.addr %s277, 2
          %s279 = scalar_lea.vmem [#allocation7], %s278
          %280 = dma.done %s276, 32
        $region48: #{tpu_custom_call.1} parent=43 // pred_fallthru
          _
      $region44: #{tpu_custom_call.1} parent=5 // pred_fallthru
        _
    $region6: #{tpu_custom_call.1} parent=1 // loop_footer
      %s21 = sadd.s32 1, %s17
    $region7: #{tpu_custom_call.1} parent=1 // loop_footer_branch
      %16 = sbr.rel target = $region3
    $region8: #{tpu_custom_call.1} parent=1 // loop_exit
      _
    %281 = vsyncpa [#allocation3], 1
    %s282 = scalar_lea.sflag [#allocation3], 1
    %283 = vsyncpa %s282, 1
    %284 = vsyncpa [#allocation6], 1
    %s285 = scalar_lea.sflag [#allocation6], 1
    %286 = vsyncpa %s285, 1
    %287 = vsyncpa [#allocation4], 1
    %s288 = scalar_lea.sflag [#allocation4], 1
    %289 = vsyncpa %s288, 1

</llo_original>
